<compile_context>
chip_gen: v6e
topology: v6e:2x2x1
jax: 0.10.0
libtpu: 0.0.40
codegen_flags: <defaults>
</compile_context>

<pallas_src>
import jax
import jax.numpy as jnp
from jax.experimental import pallas as pl
from jax.experimental.pallas import tpu as pltpu


def _cdiv(a: int, b: int) -> int:
    return (a + b - 1) // b


def _cmvc_kernel(mag_ref, x_ref, out_ref):
    # mag_ref: (1,) f32 scalar in SMEM
    # x_ref:   (TB, 2, TL)  -- axis 1 holds [real ; imag]
    # out_ref: (TB, TL)
    v = x_ref[...]
    re = v[:, 0, :].astype(jnp.float32)
    im = v[:, 1, :].astype(jnp.float32)
    # Overflow/underflow-safe complex magnitude (hypot-style): scale by the
    # larger component before squaring.  sqrt/divide go to the EUP, which has
    # plenty of slack in this HBM-bound streaming kernel.
    a = jnp.abs(re)
    b = jnp.abs(im)
    hi = jnp.maximum(a, b)
    lo = jnp.minimum(a, b)
    ratio = lo / jnp.where(hi > 0.0, hi, 1.0)
    mag = hi * jnp.sqrt(1.0 + ratio * ratio)
    out_ref[...] = (mag_ref[0] - mag).astype(out_ref.dtype)


def _choose_tiles(n: int, p: int, itemsize: int,
                  budget_bytes: int = 20 << 20) -> tuple[int, int]:
    """Pick (TB, TL): batch rows and lane width per block.

    Compile-safe constraints honored:
      * output block (TB, TL): TB is a multiple of the sublane pack
        (8 f32 / 16 bf16) or TB == n; TL is a multiple of 128 or TL == p.
      * input block (TB, 2, TL): the size-2 axis equals its full extent.
    Perf goals:
      * multi-MiB blocks (amortize per-grid-step overhead), batch folding for
        small H*W, double-buffered residency under `budget_bytes` (accounting
        for the sublane padding of the size-2 input axis), and >= 2 grid steps
        when possible so both v7x TensorCores get work.
    """
    spack = (8 * 4) // itemsize                   # 8 (f32) / 16 (bf16) / 32 (i8)

    def pad_rows(r: int) -> int:
        return _cdiv(r, spack) * spack

    def residency(tb: int, tl: int) -> int:
        in_blk = tb * pad_rows(2) * tl * itemsize   # (tb, 2, tl): (2,tl) pads to (spack,tl)
        out_blk = pad_rows(tb) * tl * itemsize      # (tb, tl)
        return 2 * (in_blk + out_blk)               # double-buffered input + output

    # Batch rows per block: a full sublane group when the batch allows it.
    tb = min(n, spack)

    # Widest multiple-of-128 lane tile within the VMEM budget.
    tl = max(128, (budget_bytes // residency(tb, 1)) // 128 * 128)
    tl = min(tl, _cdiv(p, 128) * 128)
    if tl > p:                                      # small p: use the full extent
        tl = p

    # If the lane axis is fully covered, fold more batch rows into the block.
    if tl >= p:
        while tb < n:
            nxt = min(n, tb + spack)
            if residency(nxt, tl) > budget_bytes:
                break
            tb = nxt

    # Keep >= 2 grid steps when possible (only v7x's two TensorCores care).
    if _cdiv(n, tb) * _cdiv(p, tl) < 2:
        if p > 128:
            tl = max(128, _cdiv(_cdiv(p, 2), 128) * 128)
        elif n > spack:
            tb = max(spack, _cdiv(_cdiv(n, 2), spack) * spack)
    return tb, tl


def complex_magnitude_value_constraint(x: jax.Array, magnitude: float = 1.0) -> jax.Array:
    """x: (N, C, H, W) real array, C even. Returns magnitude - |make_complex(x)|,
    shape (N, C//2, H, W)."""
    n, c, h, w = x.shape
    assert c % 2 == 0, "channel dim must be even (real/imag halves)"
    ch = c // 2
    p = ch * h * w

    # Metadata-only reshape: axis 1 selects {real, imag}; the per-component
    # (ch, h, w) volume is flattened onto the lane axis so the lane tile is a
    # large multiple of 128 regardless of H*W (lane-dense, unmasked stores).
    x3 = x.reshape(n, 2, p)
    mag_arr = jnp.full((1,), magnitude, dtype=jnp.float32)

    itemsize = jnp.dtype(x.dtype).itemsize
    tb, tl = _choose_tiles(n, p, itemsize)
    grid = (_cdiv(n, tb), _cdiv(p, tl))

    out2d = pl.pallas_call(
        _cmvc_kernel,
        out_shape=jax.ShapeDtypeStruct((n, p), x.dtype),
        grid=grid,
        in_specs=[
            pl.BlockSpec(memory_space=pltpu.MemorySpace.SMEM),      # magnitude scalar
            pl.BlockSpec((tb, 2, tl), lambda b, l: (b, 0, l)),      # real+imag block
        ],
        out_specs=pl.BlockSpec((tb, tl), lambda b, l: (b, l)),
        compiler_params=pltpu.CompilerParams(
            dimension_semantics=("parallel", "parallel"),
            # Raise v5e's 16 MiB scoped-VMEM default; 32 MiB is already the
            # default on v6e/v7x and safely under v7x's 64 MiB physical VMEM.
            vmem_limit_bytes=32 * 1024 * 1024,
        ),
    )(mag_arr, x3)

    return out2d.reshape(n, ch, h, w)


if __name__ == "__main__":
    key = jax.random.PRNGKey(0)
    # Small NCHW input: batch=2, channels=4 (2 real + 2 imag), spatial=16x16.
    x = jax.random.normal(key, (2, 4, 16, 16), dtype=jnp.float32)

    out = complex_magnitude_value_constraint(x, magnitude=1.0)
    out = jax.block_until_ready(out)

    # Reference check in plain JAX.
    real = x[:, :2]
    imag = x[:, 2:]
    ref = 1.0 - jnp.sqrt(real * real + imag * imag)
    assert out.shape == (2, 2, 16, 16)
    assert jnp.allclose(out, ref, atol=1e-5, rtol=1e-5)

    print("KERNEL_OK")
</pallas_src>

<mosaic_0001>
module attributes {stable_mosaic.version = 11 : i64} {
  func.func @_cmvc_kernel(%arg0: i32, %arg1: i32, %arg2: memref<1xf32, #tpu.memory_space<smem>>, %arg3: memref<2x2x256xf32, #tpu.memory_space<vmem>>, %arg4: memref<2x256xf32, #tpu.memory_space<vmem>>) attributes {dimension_semantics = [#tpu.dimension_semantics<parallel>, #tpu.dimension_semantics<parallel>], iteration_bounds = array<i64: 1, 2>, scalar_prefetch = 0 : i64, scratch_operands = 0 : i64, tpu.core_type = #tpu.core_type<tc>, window_params = [{transform_indices = @transform_0, window_bounds = array<i64: 1>}, {transform_indices = @transform_1, window_bounds = array<i64: 2, 2, 256>}, {transform_indices = @transform_2, window_bounds = array<i64: 2, 256>}]} {
    %c0 = arith.constant 0 : index
    %c0_0 = arith.constant 0 : index
    %c0_1 = arith.constant 0 : index
    %0 = vector.load %arg3[%c0, %c0_0, %c0_1] : memref<2x2x256xf32, #tpu.memory_space<vmem>>, vector<2x2x256xf32>
    %1 = vector.extract_strided_slice %0 {offsets = [0, 0, 0], sizes = [2, 1, 256], strides = [1, 1, 1]} : vector<2x2x256xf32> to vector<2x1x256xf32>
    %2 = vector.shape_cast %1 : vector<2x1x256xf32> to vector<2x256xf32>
    %3 = vector.extract_strided_slice %0 {offsets = [0, 1, 0], sizes = [2, 1, 256], strides = [1, 1, 1]} : vector<2x2x256xf32> to vector<2x1x256xf32>
    %4 = vector.shape_cast %3 : vector<2x1x256xf32> to vector<2x256xf32>
    %5 = math.absf %2 : vector<2x256xf32>
    %6 = math.absf %4 : vector<2x256xf32>
    %7 = arith.maximumf %5, %6 : vector<2x256xf32>
    %8 = arith.minimumf %5, %6 : vector<2x256xf32>
    %cst = arith.constant 0.000000e+00 : f32
    %9 = vector.broadcast %cst : f32 to vector<2x256xf32>
    %10 = arith.cmpf ogt, %7, %9 : vector<2x256xf32>
    %cst_2 = arith.constant 1.000000e+00 : f32
    %11 = vector.broadcast %cst_2 : f32 to vector<2x256xf32>
    %12 = arith.select %10, %7, %11 : vector<2x256xi1>, vector<2x256xf32>
    %13 = arith.divf %8, %12 : vector<2x256xf32>
    %14 = arith.mulf %13, %13 : vector<2x256xf32>
    %cst_3 = arith.constant 1.000000e+00 : f32
    %15 = vector.broadcast %cst_3 : f32 to vector<2x256xf32>
    %16 = arith.addf %15, %14 : vector<2x256xf32>
    %17 = math.sqrt %16 : vector<2x256xf32>
    %18 = arith.mulf %7, %17 : vector<2x256xf32>
    %c0_4 = arith.constant 0 : index
    %19 = memref.load %arg2[%c0_4] : memref<1xf32, #tpu.memory_space<smem>>
    %20 = vector.broadcast %19 : f32 to vector<2x256xf32>
    %21 = arith.subf %20, %18 : vector<2x256xf32>
    %c0_5 = arith.constant 0 : index
    %c0_6 = arith.constant 0 : index
    %22 = vector.load %arg4[%c0_5, %c0_6] : memref<2x256xf32, #tpu.memory_space<vmem>>, vector<2x256xf32>
    tpu.vector_store %arg4[%c0_5, %c0_6], %21 {strides = array<i32>} : memref<2x256xf32, #tpu.memory_space<vmem>>, vector<2x256xf32>,
    return
  }
  func.func @transform_0(%arg0: i32, %arg1: i32) -> i32 {
    %c0_i32 = arith.constant 0 : i32
    %c0_i32_0 = arith.constant 0 : i32
    return %c0_i32 : i32
  }
  func.func @transform_1(%arg0: i32, %arg1: i32) -> (i32, i32, i32) {
    %c0_i32 = arith.constant 0 : i32
    %c0_i32_0 = arith.constant 0 : i32
    return %arg0, %c0_i32, %arg1 : i32, i32, i32
  }
  func.func @transform_2(%arg0: i32, %arg1: i32) -> (i32, i32) {
    %c0_i32 = arith.constant 0 : i32
    return %arg0, %arg1 : i32, i32
  }
}

</mosaic_0001>

<llo_original>
// kernel: tpu_custom_call.1
$region0: #{tpu_custom_call.1}
  #allocation0 [shape = 'u32[]', space=smem, size = 0x4, offset = 0x4, fixed_abs, tag = 'smem constant byte address 0x4 - core index']
  #allocation1 [shape = 'u32[144,128]{1,0:T(1,128)}', space=vmem, size = 0x12000, scoped, tag = 'internal scratch']
  #allocation2 [shape = 'f32[1]{0:T(128)S(6)}', space=smem, size = 0x200, scoped, tag = 'scoped memory for tpu_custom_call.1']
  %s0 = inlined_call_operand.<no memory space> [shape: f32[1], index: 0, kind: input, shape index: {}]
  %s1 = inlined_call_operand.hbm [shape: f32[2,2,512], index: 1, kind: input, shape index: {}]
  %s2 = inlined_call_operand.hbm [shape: f32[2,512], index: 2, kind: output, shape index: {}]
  %s3 = sld [smem:[#allocation0]]
  $region45: #{tpu_custom_call.1} parent=0
    _
  %s5 = ssub.s32 1, %s3
  %s6 = scalar_select 0, %s5, %s3
  %7 = sst [smem:[#allocation2]] %s0
  $region1: #{tpu_custom_call.1} parent=0
    #allocation3 [shape = 'u8[8192]{0}', space=vmem, size = 0x2000, scoped, tag = 'input window, operand 1']
    #allocation4 [shape = 's32[2]{0}', space=sflag, size = 0x8, scoped, tag = 'scoped memory for tpu_custom_call.1']
    #allocation5 [shape = 's32[2]{0}', space=sflag, size = 0x8, scoped, tag = 'scoped memory for tpu_custom_call.1']
    #allocation6 [shape = 'u8[4096]{0}', space=vmem, size = 0x1000, scoped, tag = 'output window, operand 0']
    %8 = vsyncpa [#allocation4], 0
    %s9 = scalar_lea.sflag [#allocation4], 1
    %10 = vsyncpa %s9, 0
    %11 = vsyncpa [#allocation5], 0
    %s12 = scalar_lea.sflag [#allocation5], 1
    %13 = vsyncpa %s12, 0
    loop: start=0, step=1, limit=4
    $region2: #{tpu_custom_call.1} parent=1 // loop_pre_header
      _
    $region3: #{tpu_custom_call.1} parent=1 // loop_header
      %s15 = sphi 0, %s19
      %p16 = scmp.ge.s32.totalorder %s15, 4
      %s22 = sphi 0, %s34
      %s23 = sphi 0, %s30
      %s24 = sphi 0, %s22
      %s25 = sphi 0, %s23
      %s26 = sphi 0, %s24
      %s27 = sphi 0, %s25
      %s35 = sphi 0, %s35
      %s37 = sphi 0, %s35
      %s38 = sphi 0, %s37
      %s52 = sphi 0, %s38
      %s60 = sphi 0, %s62
      %s63 = sphi 0, %s60
      %s64 = sphi 0, %s63
      %s80 = sphi 0, %s64
      %s88 = sphi 0, %s90
      %s91 = sphi 0, %s88
      %s92 = sphi 0, %s91
      %s108 = sphi 0, %s92
    $region4: #{tpu_custom_call.1} parent=1 // loop_header_branch
      %18 = sbr.rel (%p16) target = $region8
    $region5: #{tpu_custom_call.1} parent=1 // loop_body
      %s20 = ssub.s32 %s15, 1
      %s21 = ssub.s32 %s15, 2
      %s28 = sadd.s32 1, %s23
      %p29 = scmp.ge.s32.totalorder %s28, 2
      %s30 = scalar_select %p29, 0, %s28
      %s31 = sadd.s32 1, %s22
      %s32 = scalar_select %p29, %s31, %s22
      %p33 = scmp.ge.s32.totalorder %s32, 1
      %s34 = scalar_select %p33, 0, %s32
      %s36 = sadd.s32 %s35, 1
      %p39 = scmp.eq.s32.totalorder %s15, 1
      %p40 = scmp.ne.s32.totalorder %s35, %s37
      %p41 = scmp.eq.s32.totalorder %s15, 0
      %p42 = por %p40, %p41
      %p43 = scmp.ne.s32.totalorder %s35, %s37
      %p44 = scmp.eq.s32.totalorder %s20, 1
      %p45 = por %p43, %p44
      %p46 = scmp.ne.s32.totalorder %s37, %s38
      %p47 = scmp.eq.s32.totalorder %s20, 0
      %p48 = por %p46, %p47
      %p49 = scmp.ne.s32.totalorder %s37, %s38
      %p50 = scmp.eq.s32.totalorder %s21, 1
      %p51 = por %p49, %p50
      %p53 = scmp.ne.s32.totalorder %s38, %s52
      %p54 = scmp.eq.s32.totalorder %s21, 0
      %p55 = por %p53, %p54
      %s56 = ssub.s32 %s22, %s34
      %s57 = ssub.s32 %s23, %s30
      %s58 = sor.u32 %s56, %s57
      %p59 = scmp.eq.s32.totalorder %s58, 0
      %s61 = sadd.s32 %s60, 1
      %s62 = scalar_select %p59, %s60, %s61
      %p65 = pneg %p59
      %p66 = scmp.eq.s32.totalorder %s15, 1
      %p67 = por %p65, %p66
      %p68 = scmp.ne.s32.totalorder %s60, %s63
      %p69 = scmp.eq.s32.totalorder %s15, 0
      %p70 = por %p68, %p69
      %p71 = scmp.ne.s32.totalorder %s60, %s63
      %p72 = scmp.eq.s32.totalorder %s20, 1
      %p73 = por %p71, %p72
      %p74 = scmp.ne.s32.totalorder %s63, %s64
      %p75 = scmp.eq.s32.totalorder %s20, 0
      %p76 = por %p74, %p75
      %p77 = scmp.ne.s32.totalorder %s63, %s64
      %p78 = scmp.eq.s32.totalorder %s21, 1
      %p79 = por %p77, %p78
      %p81 = scmp.ne.s32.totalorder %s64, %s80
      %p82 = scmp.eq.s32.totalorder %s21, 0
      %p83 = por %p81, %p82
      %s84 = ssub.s32 %s22, %s34
      %s85 = ssub.s32 %s23, %s30
      %s86 = sor.u32 %s84, %s85
      %p87 = scmp.eq.s32.totalorder %s86, 0
      %s89 = sadd.s32 %s88, 1
      %s90 = scalar_select %p87, %s88, %s89
      %p93 = pneg %p87
      %p94 = scmp.eq.s32.totalorder %s15, 1
      %p95 = por %p93, %p94
      %p96 = scmp.ne.s32.totalorder %s88, %s91
      %p97 = scmp.eq.s32.totalorder %s15, 0
      %p98 = por %p96, %p97
      %p99 = scmp.ne.s32.totalorder %s88, %s91
      %p100 = scmp.eq.s32.totalorder %s20, 1
      %p101 = por %p99, %p100
      %p102 = scmp.ne.s32.totalorder %s91, %s92
      %p103 = scmp.eq.s32.totalorder %s20, 0
      %p104 = por %p102, %p103
      %p105 = scmp.ne.s32.totalorder %s91, %s92
      %p106 = scmp.eq.s32.totalorder %s21, 1
      %p107 = por %p105, %p106
      %p109 = scmp.ne.s32.totalorder %s92, %s108
      %p110 = scmp.eq.s32.totalorder %s21, 0
      %p111 = por %p109, %p110
      %p112 = scmp.le.s32.totalorder 1, %s15
      %p113 = scmp.lt.s32.totalorder %s15, 3
      %p114 = pnand %p112, %p113
      %p115 = pneg %p114
      // Predicated region
      $region9: #{tpu_custom_call.1} parent=5 // pred_check
        _
      $region10: #{tpu_custom_call.1} parent=5 // pred_check_branch
        %117 = sbr.rel (%p114) target = $region12
      $region11: #{tpu_custom_call.1} parent=5 // pred_region
        %s118 = ssub.s32 %s15, 1
        // Predicated region
        $region13: #{tpu_custom_call.1} parent=11 // pred_check
          %p119 = pneg %p48
        $region14: #{tpu_custom_call.1} parent=11 // pred_check_branch
          %121 = sbr.rel (%p119) target = $region16
        $region15: #{tpu_custom_call.1} parent=11 // pred_region
          _
        $region16: #{tpu_custom_call.1} parent=11 // pred_fallthru
          _
      $region12: #{tpu_custom_call.1} parent=5 // pred_fallthru
        _
      %p122 = scmp.lt.s32.totalorder %s15, 2
      // Predicated region
      $region17: #{tpu_custom_call.1} parent=5 // pred_check
        %p123 = pneg %p122
      $region18: #{tpu_custom_call.1} parent=5 // pred_check_branch
        %125 = sbr.rel (%p123) target = $region20
      $region19: #{tpu_custom_call.1} parent=5 // pred_region
        // Predicated region
        $region21: #{tpu_custom_call.1} parent=19 // pred_check
          %p126 = pneg %p70
        $region22: #{tpu_custom_call.1} parent=19 // pred_check_branch
          %128 = sbr.rel (%p126) target = $region24
        $region23: #{tpu_custom_call.1} parent=19 // pred_region
          %s129 = sand.u32 %s60, 1
          %s130 = scalar_lea.sflag [#allocation4], %s129
          %s131 = sand.u32 %s60, 1
          %s132 = smul.addr %s131, 8
          %s133 = scalar_lea.vmem [#allocation3], %s132
          %s134 = smul.u32 2, %s22
          %s135 = smul.u32 2, %s23
          %s137 = ssub.s32 128, 128
          %138 = vsyncadd %s130, %s137
          %s139 = smul.addr %s134, 4
          %s140 = sadd.s32 %s135, %s139
          %s141 = smul.addr %s140, 32
          %s142 = scalar_lea.hbm %s1, %s141
          %s143 = sshll.u32 %s133, 4
          %s144 = int_to_ptr.vmem [resolvable:$true] %s143
          %149 = dma.hbm_to_vmem [thread:$0]  %s142, 128, %s144, %s130, 128, 64, 4
        $region24: #{tpu_custom_call.1} parent=19 // pred_fallthru
          _
      $region20: #{tpu_custom_call.1} parent=5 // pred_fallthru
        _
      %p150 = scmp.le.s32.totalorder 1, %s15
      %p151 = scmp.lt.s32.totalorder %s15, 3
      %p152 = pnand %p150, %p151
      %p153 = pneg %p152
      // Predicated region
      $region25: #{tpu_custom_call.1} parent=5 // pred_check
        _
      $region26: #{tpu_custom_call.1} parent=5 // pred_check_branch
        %155 = sbr.rel (%p152) target = $region28
      $region27: #{tpu_custom_call.1} parent=5 // pred_region
        %s156 = ssub.s32 %s15, 1
        %s157 = sand.u32 %s63, 1
        %s158 = scalar_lea.sflag [#allocation4], %s157
        %s159 = sand.u32 %s63, 1
        %s160 = smul.addr %s159, 8
        %s161 = scalar_lea.vmem [#allocation3], %s160
        // Predicated region
        $region29: #{tpu_custom_call.1} parent=27 // pred_check
          %p162 = pneg %p76
        $region30: #{tpu_custom_call.1} parent=27 // pred_check_branch
          %164 = sbr.rel (%p162) target = $region32
        $region31: #{tpu_custom_call.1} parent=27 // pred_region
          %165 = dma.done %s158, 128
        $region32: #{tpu_custom_call.1} parent=27 // pred_fallthru
          _
        %p166 = pneg %p48
        %p167 = pneg %p45
        %s168 = sand.u32 %s63, 1
        %s169 = scalar_lea.sflag [#allocation4], %s168
        %s170 = sand.u32 %s63, 1
        %s171 = smul.addr %s170, 8
        %s172 = scalar_lea.vmem [#allocation3], %s171
        %p173 = pneg %p76
        %p174 = pneg %p73
        %p175 = pneg %p104
        %p176 = pneg %p101
        %s177 = sand.u32 %s91, 1
        %s178 = scalar_lea.sflag [#allocation5], %s177
        %s179 = sand.u32 %s91, 1
        %s180 = smul.addr %s179, 4
        %s181 = scalar_lea.vmem [#allocation6], %s180
        %s182 = smul.u32 2, %s24
        %s183 = smul.u32 2, %s25
        %s184 = smul.u32 2, %s25
        %v185 = vld [vmem:[%s161] sm:$0xf]
        %v186 = vld [vmem:[%s161 + $0x4] sm:$0xf]
        %v187 = vand.u32 2147483647, %v185
        %v188 = vand.u32 2147483647, %v186
        %v191 = vrot.slane %v187, 7
        %v192 = vrot.slane %v191, 2
        %v193 = vrot.slane %v188, 7
        %v194 = vrot.slane %v193, 2
        %v197 = vmax.f32 %v187, %v192
        %v198 = vmax.f32 %v188, %v194
        %v199 = vmin.f32 %v187, %v192
        %v200 = vmin.f32 %v188, %v194
        %vm201 = vcmp.gt.f32.partialorder %v197, 0.0
        %vm202 = vcmp.gt.f32.partialorder %v198, 0.0
        %v203 = vsel %vm201, %v197, 1.0
        %v204 = vsel %vm202, %v198, 1.0
        %v205 = vrcp.pop %v203
        %v206 = vmul.f32 %v199, %v205
        %v207 = vrcp.pop %v204
        %v208 = vmul.f32 %v200, %v207
        %v209 = vmul.f32 %v206, %v206
        %v210 = vmul.f32 %v208, %v208
        %v211 = vadd.f32 %v209, 1.0
        %v212 = vadd.f32 %v210, 1.0
        %v213 = vrsqrt.pop %v211
        %v214 = vmul.f32 %v211, %v213
        %vm215 = vcmp.eq.f32.partialorder %v211, inf
        %v216 = vsel %vm215, %v211, %v214
        %vm217 = vcmp.eq.f32.partialorder %v211, 0.0
        %v218 = vand.u32 %v211, 2147483648
        %v219 = vsel %vm217, %v218, %v216
        %v220 = vrsqrt.pop %v212
        %v221 = vmul.f32 %v212, %v220
        %vm222 = vcmp.eq.f32.partialorder %v212, inf
        %v223 = vsel %vm222, %v212, %v221
        %vm224 = vcmp.eq.f32.partialorder %v212, 0.0
        %v225 = vand.u32 %v212, 2147483648
        %v226 = vsel %vm224, %v225, %v223
        %v227 = vmul.f32 %v197, %v219
        %v228 = vmul.f32 %v198, %v226
        %s229 = sld [smem:[#allocation2]]
        %v230 = vstv %s229
        %v231 = vsub.f32 %v230, %v227
        %v232 = vsub.f32 %v230, %v228
        %vm235 = vcmask 1044484
        %v236 = vsel %vm235, %v231, %v231
        %vm237 = vcmask 1046534
        %v238 = vsel %vm237, %v231, %v236
        %v239 = vrot.slane %v232, 7
        %vm240 = vcmask 1041409
        %v241 = vsel %vm240, %v239, %v238
        %vm242 = vcmask 1043459
        %v243 = vsel %vm242, %v239, %v241
        %vm244 = vcmask 1045509
        %v245 = vsel %vm244, %v239, %v243
        %vm246 = vcmask 1047559
        %v247 = vsel %vm246, %v239, %v245
        %249 = vst [vmem:[%s181] sm:$0xf] %v247
        %s250 = sand.u32 %s91, 1
        %s251 = scalar_lea.sflag [#allocation5], %s250
        %s252 = sand.u32 %s91, 1
        %s253 = smul.addr %s252, 4
        %s254 = scalar_lea.vmem [#allocation6], %s253
        // Predicated region
        $region33: #{tpu_custom_call.1} parent=27 // pred_check
          %p255 = pneg %p101
        $region34: #{tpu_custom_call.1} parent=27 // pred_check_branch
          %257 = sbr.rel (%p255) target = $region36
        $region35: #{tpu_custom_call.1} parent=27 // pred_region
          %s258 = smul.u32 2, %s25
          %s260 = ssub.s32 64, 64
          %261 = vsyncadd %s251, %s260
          %s262 = smul.addr %s24, 4
          %s263 = sadd.s32 %s258, %s262
          %s264 = smul.addr %s263, 32
          %s265 = scalar_lea.hbm %s2, %s264
          %s267 = sshll.u32 %s254, 4
          %s268 = int_to_ptr.vmem [resolvable:$true] %s267
          %270 = dma.vmem_to_hbm [thread:$0]  %s268, 64, %s265, %s251
        $region36: #{tpu_custom_call.1} parent=27 // pred_fallthru
          _
      $region28: #{tpu_custom_call.1} parent=5 // pred_fallthru
        _
      %p271 = scmp.le.s32.totalorder 2, %s15
      // Predicated region
      $region37: #{tpu_custom_call.1} parent=5 // pred_check
        %p272 = pneg %p271
      $region38: #{tpu_custom_call.1} parent=5 // pred_check_branch
        %274 = sbr.rel (%p272) target = $region40
      $region39: #{tpu_custom_call.1} parent=5 // pred_region
        %s275 = ssub.s32 %s15, 2
        // Predicated region
        $region41: #{tpu_custom_call.1} parent=39 // pred_check
          %p276 = pneg %p107
        $region42: #{tpu_custom_call.1} parent=39 // pred_check_branch
          %278 = sbr.rel (%p276) target = $region44
        $region43: #{tpu_custom_call.1} parent=39 // pred_region
          %s279 = sand.u32 %s92, 1
          %s280 = scalar_lea.sflag [#allocation5], %s279
          %s281 = sand.u32 %s92, 1
          %s282 = smul.addr %s281, 4
          %s283 = scalar_lea.vmem [#allocation6], %s282
          %284 = dma.done %s280, 64
        $region44: #{tpu_custom_call.1} parent=39 // pred_fallthru
          _
      $region40: #{tpu_custom_call.1} parent=5 // pred_fallthru
        _
    $region6: #{tpu_custom_call.1} parent=1 // loop_footer
      %s19 = sadd.s32 1, %s15
    $region7: #{tpu_custom_call.1} parent=1 // loop_footer_branch
      %14 = sbr.rel target = $region3
    $region8: #{tpu_custom_call.1} parent=1 // loop_exit
      _
    %285 = vsyncpa [#allocation4], 1
    %s286 = scalar_lea.sflag [#allocation4], 1
    %287 = vsyncpa %s286, 1
    %288 = vsyncpa [#allocation5], 1
    %s289 = scalar_lea.sflag [#allocation5], 1
    %290 = vsyncpa %s289, 1

</llo_original>
